<compile_context>
chip_gen: v6e
topology: v6e:2x2x1
jax: 0.10.0
libtpu: 0.0.40
codegen_flags: <defaults>
</compile_context>

<pallas_src>
import functools

import jax
import jax.numpy as jnp
from jax.experimental import pallas as pl
from jax.experimental.pallas import tpu as pltpu


def _round_up(x, m):
    return (x + m - 1) // m * m


def _vmem_limit_bytes():
    # v5e/v6e: 128 MiB physical VMEM -> allow a large scoped budget.
    # v7x (and unknown chips): only 64 MiB physical -> leave headroom.
    try:
        kind = jax.devices()[0].device_kind.lower()
    except Exception:
        kind = ""
    if "v5" in kind or "v6" in kind:
        return 96 * 1024 * 1024
    return 48 * 1024 * 1024


def image_embedder_forward(x_nchw, w_conv, b_conv, w_cls, b_cls,
                           *, normalize=True, tile_pixels=512):
    """Fused 3x3 'same' conv -> ReLU -> global-avg-pool -> Linear -> optional L2 norm."""
    B, C, H, W = x_nchw.shape
    F = w_conv.shape[0]                 # conv weight: (F, C, 3, 3)  (torch OIHW)
    E = w_cls.shape[0]                  # classifier weight: (E, F)  (torch nn.Linear)
    P = H * W                           # pixels per image
    K9 = 9 * C                          # im2col contraction width

    tP = _round_up(min(tile_pixels, P), 8)          # pixel-tile (sublane aligned)
    n_tiles = pl.cdiv(P, tP)
    P_pad = n_tiles * tP
    K_pad = _round_up(K9, 8)                        # sublane-friendly contraction dim
    F_pad = _round_up(F, 128)                       # lane-dense conv output / pooled
    E_pad = _round_up(E, 128)                       # lane-dense final output
    inv_hw = 1.0 / float(P)

    # ---- layout plumbing only (no compute hoisted) -------------------------------
    # NCHW -> NHWC, zero-pad spatial by 1, im2col to (B, P, 9*C) in bf16.
    x = jnp.transpose(x_nchw, (0, 2, 3, 1)).astype(jnp.bfloat16)      # (B, H, W, C)
    xp = jnp.pad(x, ((0, 0), (1, 1), (1, 1), (0, 0)))                 # (B, Hp, Wp, C)
    patches = jnp.concatenate(
        [xp[:, dy:dy + H, dx:dx + W, :] for dy in range(3) for dx in range(3)],
        axis=-1)                                                      # (B, H, W, 9C)
    patches = patches.reshape(B, P, K9)
    patches = jnp.pad(patches, ((0, 0), (0, P_pad - P), (0, K_pad - K9)))

    # conv weight (F, C, 3, 3) -> (9*C, F_pad) bf16: one fused matmul operand.
    w9 = jnp.transpose(w_conv, (2, 3, 1, 0)).reshape(K9, F)           # (9C, F)
    w9 = jnp.pad(w9, ((0, K_pad - K9), (0, F_pad - F))).astype(jnp.bfloat16)
    bconv = jnp.pad(b_conv.astype(jnp.float32), (0, F_pad - F)).reshape(1, F_pad)
    wcls = jnp.pad(jnp.transpose(w_cls.astype(jnp.float32)),
                   ((0, F_pad - F), (0, E_pad - E)))                  # (F_pad, E_pad)
    bcls = jnp.pad(b_cls.astype(jnp.float32), (0, E_pad - E)).reshape(1, E_pad)

    def _head(pooled, wcls_ref, bcls_ref):
        # classifier + optional F.normalize(dim=-1); padded cols are exactly zero.
        emb = jnp.dot(pooled, wcls_ref[...],
                      preferred_element_type=jnp.float32) + bcls_ref[...]
        if normalize:
            ssq = jnp.sum(emb * emb, axis=-1, keepdims=True)
            emb = emb * jax.lax.rsqrt(jnp.maximum(ssq, 1e-24))
        return emb

    def kernel(p_ref, w9_ref, bconv_ref, wcls_ref, bcls_ref, out_ref, acc_ref):
        t = pl.program_id(1)

        # Fused 3x3 conv over tP pixels: single (tP, 9C) x (9C, F) MXU dot.
        conv = jnp.dot(p_ref[0], w9_ref[...], preferred_element_type=jnp.float32)
        act = jnp.maximum(conv + bconv_ref[...], 0.0)                 # ReLU before pool

        if P_pad != P:
            # Only the zero-padded tail rows of the last tile need masking
            # (ReLU(bias) would otherwise pollute the pool); single compare+select.
            pos = t * tP + jax.lax.broadcasted_iota(jnp.int32, (tP, 1), 0)
            act = jnp.where(pos < P, act, 0.0)

        tile_sum = jnp.sum(act, axis=0, keepdims=True)                # (1, F_pad), XLU

        if n_tiles == 1:
            # Tiny-input fast path: no accumulator round-trip, no cold branches.
            out_ref[...] = _head(tile_sum * inv_hw, wcls_ref, bcls_ref)[None]
        else:
            @pl.when(t == 0)
            def _init():
                acc_ref[...] = jnp.zeros_like(acc_ref)

            acc_ref[...] += tile_sum

            @pl.when(t == pl.num_programs(1) - 1)
            def _finalize():
                out_ref[...] = _head(acc_ref[...] * inv_hw, wcls_ref, bcls_ref)[None]

        # TODO(synk): for very large images, replace wrapper-side im2col with
        # streamed row-tile DMA (1-row halo, manual double-buffered make_async_copy)
        # to avoid the 9x HBM inflation of the patch slab.

    resident = dict(pipeline_mode=pl.Buffered(1))    # constant blocks: single-buffer

    out = pl.pallas_call(
        kernel,
        out_shape=jax.ShapeDtypeStruct((B, 1, E_pad), jnp.float32),
        grid_spec=pltpu.PrefetchScalarGridSpec(
            num_scalar_prefetch=0,
            grid=(B, n_tiles),
            in_specs=[
                pl.BlockSpec((1, tP, K_pad), lambda b, t: (b, t, 0)),            # patches
                pl.BlockSpec((K_pad, F_pad), lambda b, t: (0, 0), **resident),   # conv W
                pl.BlockSpec((1, F_pad), lambda b, t: (0, 0), **resident),       # conv b
                pl.BlockSpec((F_pad, E_pad), lambda b, t: (0, 0), **resident),   # cls W
                pl.BlockSpec((1, E_pad), lambda b, t: (0, 0), **resident),       # cls b
            ],
            out_specs=pl.BlockSpec((1, 1, E_pad), lambda b, t: (b, 0, 0)),
            scratch_shapes=[pltpu.VMEM((1, F_pad), jnp.float32)],
        ),
        compiler_params=pltpu.CompilerParams(
            dimension_semantics=("parallel", "arbitrary"),   # batch // pixel-tile reduce
            vmem_limit_bytes=_vmem_limit_bytes(),
        ),
    )(patches, w9, bconv, wcls, bcls)

    return out[:, 0, :E]


def image_embedder_reference(x_nchw, w_conv, b_conv, w_cls, b_cls, *, normalize=True):
    """Pure-JAX f32 reference with the same synthetic weights."""
    x = x_nchw.astype(jnp.float32)
    y = jax.lax.conv_general_dilated(
        x, w_conv.astype(jnp.float32), window_strides=(1, 1),
        padding=((1, 1), (1, 1)),
        dimension_numbers=("NCHW", "OIHW", "NCHW"),
        precision=jax.lax.Precision.HIGHEST)
    y = jnp.maximum(y + b_conv.reshape(1, -1, 1, 1), 0.0)
    pooled = jnp.mean(y, axis=(2, 3))                                 # (B, F)
    emb = jnp.dot(pooled, w_cls.T.astype(jnp.float32),
                  precision=jax.lax.Precision.HIGHEST) + b_cls.astype(jnp.float32)
    if normalize:
        nrm = jnp.sqrt(jnp.sum(emb * emb, axis=-1, keepdims=True))
        emb = emb / jnp.maximum(nrm, 1e-12)
    return emb


if __name__ == "__main__":
    B, C, H, W = 2, 4, 16, 16       # small image batch
    F, E = 128, 512                 # internal_embedding_size, embedding_size

    key = jax.random.PRNGKey(0)
    kx, kw, kb, kc, kd = jax.random.split(key, 5)
    x = jax.random.normal(kx, (B, C, H, W), jnp.float32)
    w_conv = jax.random.normal(kw, (F, C, 3, 3), jnp.float32) * (1.0 / (C * 9) ** 0.5)
    b_conv = jax.random.normal(kb, (F,), jnp.float32) * 0.1
    w_cls = jax.random.normal(kc, (E, F), jnp.float32) * (1.0 / F ** 0.5)
    b_cls = jax.random.normal(kd, (E,), jnp.float32) * 0.1

    fwd = jax.jit(functools.partial(image_embedder_forward, normalize=True))
    out = jax.block_until_ready(fwd(x, w_conv, b_conv, w_cls, b_cls))

    ref = image_embedder_reference(x, w_conv, b_conv, w_cls, b_cls, normalize=True)
    err = float(jnp.max(jnp.abs(out - ref)))
    assert out.shape == (B, E), out.shape
    assert err < 5e-3, f"max abs error vs reference: {err}"
    print("KERNEL_OK")
</pallas_src>

<mosaic_0001>
module attributes {stable_mosaic.version = 11 : i64} {
  func.func @kernel(%arg0: i32, %arg1: i32, %arg2: memref<1x256x40xbf16, #tpu.memory_space<vmem>>, %arg3: memref<40x128xbf16, #tpu.memory_space<vmem>>, %arg4: memref<1x128xf32, #tpu.memory_space<vmem>>, %arg5: memref<128x512xf32, #tpu.memory_space<vmem>>, %arg6: memref<1x512xf32, #tpu.memory_space<vmem>>, %arg7: memref<1x1x512xf32, #tpu.memory_space<vmem>>, %arg8: memref<1x128xf32, #tpu.memory_space<vmem>>) attributes {dimension_semantics = [#tpu.dimension_semantics<parallel>, #tpu.dimension_semantics<arbitrary>], iteration_bounds = array<i64: 2, 1>, scalar_prefetch = 0 : i64, scratch_operands = 1 : i64, tpu.core_type = #tpu.core_type<tc>, window_params = [{transform_indices = @transform_0, window_bounds = array<i64: 1, 256, 40>}, {pipeline_mode = #tpu.pipeline_mode<synchronous>, transform_indices = @transform_1, window_bounds = array<i64: 40, 128>}, {pipeline_mode = #tpu.pipeline_mode<synchronous>, transform_indices = @transform_2, window_bounds = array<i64: 1, 128>}, {pipeline_mode = #tpu.pipeline_mode<synchronous>, transform_indices = @transform_3, window_bounds = array<i64: 128, 512>}, {pipeline_mode = #tpu.pipeline_mode<synchronous>, transform_indices = @transform_4, window_bounds = array<i64: 1, 512>}, {transform_indices = @transform_5, window_bounds = array<i64: 1, 1, 512>}]} {
    %c0 = arith.constant 0 : index
    %c0_0 = arith.constant 0 : index
    %c0_1 = arith.constant 0 : index
    %0 = vector.load %arg2[%c0, %c0_0, %c0_1] : memref<1x256x40xbf16, #tpu.memory_space<vmem>>, vector<1x256x40xbf16>
    %1 = vector.shape_cast %0 : vector<1x256x40xbf16> to vector<256x40xbf16>
    %c0_2 = arith.constant 0 : index
    %c0_3 = arith.constant 0 : index
    %2 = vector.load %arg3[%c0_2, %c0_3] : memref<40x128xbf16, #tpu.memory_space<vmem>>, vector<40x128xbf16>
    %cst = arith.constant dense<0.000000e+00> : vector<256x128xf32>
    %3 = tpu.matmul %1, %2, %cst {dimension_numbers = #tpu.dot_dimension_numbers<[1], [0], [0], [1], [0, 0, 1, 1], [], []>} : vector<256x40xbf16>, vector<40x128xbf16>, vector<256x128xf32> -> vector<256x128xf32>
    %c0_4 = arith.constant 0 : index
    %c0_5 = arith.constant 0 : index
    %4 = vector.load %arg4[%c0_4, %c0_5] : memref<1x128xf32, #tpu.memory_space<vmem>>, vector<1x128xf32>
    %5 = vector.broadcast %4 : vector<1x128xf32> to vector<256x128xf32>
    %6 = arith.addf %3, %5 : vector<256x128xf32>
    %cst_6 = arith.constant 0.000000e+00 : f32
    %7 = vector.broadcast %cst_6 : f32 to vector<256x128xf32>
    %8 = arith.maximumf %6, %7 : vector<256x128xf32>
    %cst_7 = arith.constant dense<0.000000e+00> : vector<128xf32>
    %9 = vector.multi_reduction <add>, %8, %cst_7 [0] : vector<256x128xf32> to vector<128xf32>
    %10 = vector.shape_cast %9 : vector<128xf32> to vector<1x128xf32>
    %cst_8 = arith.constant 3.906250e-03 : f32
    %11 = vector.broadcast %cst_8 : f32 to vector<1x128xf32>
    %12 = arith.mulf %10, %11 : vector<1x128xf32>
    %c0_9 = arith.constant 0 : index
    %c0_10 = arith.constant 0 : index
    %13 = vector.load %arg5[%c0_9, %c0_10] : memref<128x512xf32, #tpu.memory_space<vmem>>, vector<128x512xf32>
    %cst_11 = arith.constant dense<0.000000e+00> : vector<1x512xf32>
    %14 = tpu.matmul %12, %13, %cst_11 {dimension_numbers = #tpu.dot_dimension_numbers<[1], [0], [0], [1], [0, 0, 1, 1], [], []>} : vector<1x128xf32>, vector<128x512xf32>, vector<1x512xf32> -> vector<1x512xf32>
    %c0_12 = arith.constant 0 : index
    %c0_13 = arith.constant 0 : index
    %15 = vector.load %arg6[%c0_12, %c0_13] : memref<1x512xf32, #tpu.memory_space<vmem>>, vector<1x512xf32>
    %16 = arith.addf %14, %15 : vector<1x512xf32>
    %17 = arith.mulf %16, %16 : vector<1x512xf32>
    %cst_14 = arith.constant dense<0.000000e+00> : vector<1xf32>
    %18 = vector.multi_reduction <add>, %17, %cst_14 [1] : vector<1x512xf32> to vector<1xf32>
    %19 = vector.shape_cast %18 : vector<1xf32> to vector<1x1xf32>
    %cst_15 = arith.constant 1.000000e-24 : f32
    %20 = vector.broadcast %cst_15 : f32 to vector<1x1xf32>
    %21 = arith.maximumf %19, %20 : vector<1x1xf32>
    %22 = math.rsqrt %21 : vector<1x1xf32>
    %23 = vector.broadcast %22 : vector<1x1xf32> to vector<1x512xf32>
    %24 = arith.mulf %16, %23 : vector<1x512xf32>
    %25 = vector.shape_cast %24 : vector<1x512xf32> to vector<1x1x512xf32>
    %c0_16 = arith.constant 0 : index
    %c0_17 = arith.constant 0 : index
    %c0_18 = arith.constant 0 : index
    %26 = vector.load %arg7[%c0_16, %c0_17, %c0_18] : memref<1x1x512xf32, #tpu.memory_space<vmem>>, vector<1x1x512xf32>
    tpu.vector_store %arg7[%c0_16, %c0_17, %c0_18], %25 {strides = array<i32>} : memref<1x1x512xf32, #tpu.memory_space<vmem>>, vector<1x1x512xf32>,
    return
  }
  func.func @transform_0(%arg0: i32, %arg1: i32) -> (i32, i32, i32) {
    %c0_i32 = arith.constant 0 : i32
    %c0_i32_0 = arith.constant 0 : i32
    return %arg0, %arg1, %c0_i32 : i32, i32, i32
  }
  func.func @transform_1(%arg0: i32, %arg1: i32) -> (i32, i32) {
    %c0_i32 = arith.constant 0 : i32
    %c0_i32_0 = arith.constant 0 : i32
    %c0_i32_1 = arith.constant 0 : i32
    return %c0_i32, %c0_i32_0 : i32, i32
  }
  func.func @transform_2(%arg0: i32, %arg1: i32) -> (i32, i32) {
    %c0_i32 = arith.constant 0 : i32
    %c0_i32_0 = arith.constant 0 : i32
    %c0_i32_1 = arith.constant 0 : i32
    return %c0_i32, %c0_i32_0 : i32, i32
  }
  func.func @transform_3(%arg0: i32, %arg1: i32) -> (i32, i32) {
    %c0_i32 = arith.constant 0 : i32
    %c0_i32_0 = arith.constant 0 : i32
    %c0_i32_1 = arith.constant 0 : i32
    return %c0_i32, %c0_i32_0 : i32, i32
  }
  func.func @transform_4(%arg0: i32, %arg1: i32) -> (i32, i32) {
    %c0_i32 = arith.constant 0 : i32
    %c0_i32_0 = arith.constant 0 : i32
    %c0_i32_1 = arith.constant 0 : i32
    return %c0_i32, %c0_i32_0 : i32, i32
  }
  func.func @transform_5(%arg0: i32, %arg1: i32) -> (i32, i32, i32) {
    %c0_i32 = arith.constant 0 : i32
    %c0_i32_0 = arith.constant 0 : i32
    %c0_i32_1 = arith.constant 0 : i32
    return %arg0, %c0_i32, %c0_i32_0 : i32, i32, i32
  }
}

</mosaic_0001>

<llo_original>
// kernel: image_embedder_forward.1
$region0: #{image_embedder_forward.1}
  #allocation0 [shape = 'u32[]', space=smem, size = 0x4, offset = 0x4, fixed_abs, tag = 'smem constant byte address 0x4 - core index']
  #allocation1 [shape = 'u32[144,128]{1,0:T(1,128)}', space=vmem, size = 0x12000, scoped, tag = 'internal scratch']
  #allocation2 [shape = 'f32[1,128]{1,0:T(1,128)}', space=vmem, size = 0x200, scoped, tag = 'scratch operand']
  %s0 = inlined_call_operand.vmem [shape: bf16[2,256,40], index: 0, kind: input, shape index: {}]
  %s1 = inlined_call_operand.vmem [shape: bf16[40,128], index: 1, kind: input, shape index: {}]
  %s2 = inlined_call_operand.vmem [shape: f32[1,128], index: 2, kind: input, shape index: {}]
  %s3 = inlined_call_operand.vmem [shape: f32[128,512], index: 3, kind: input, shape index: {}]
  %s4 = inlined_call_operand.vmem [shape: f32[1,512], index: 4, kind: input, shape index: {}]
  %s5 = inlined_call_operand.vmem [shape: f32[2,1,512], index: 5, kind: output, shape index: {}]
  %s6 = sld [smem:[#allocation0]]
  $region53: #{image_embedder_forward.1} parent=0
    _
  %s8 = ssub.s32 1, %s6
  %s9 = scalar_select 0, %s8, %s6
  loop: start=0, step=1, limit=4
  $region2: #{image_embedder_forward.1} parent=0 // loop_pre_header
    _
  $region3: #{image_embedder_forward.1} parent=0 // loop_header
    %s11 = sphi 0, %s15
    %p12 = scmp.ge.s32.totalorder %s11, 4
    %s18 = sphi 0, %s30
    %s19 = sphi 0, %s26
    %s20 = sphi 0, %s18
    %s21 = sphi 0, %s19
    %s22 = sphi 0, %s20
    %s23 = sphi 0, %s21
    %s35 = sphi 0, %s37
    %s38 = sphi 0, %s35
    %s39 = sphi 0, %s38
    %s55 = sphi 0, %s39
    %s59 = sphi 0, %s59
    %s61 = sphi 0, %s59
    %s62 = sphi 0, %s61
    %s76 = sphi 0, %s62
    %s80 = sphi 0, %s80
    %s82 = sphi 0, %s80
    %s83 = sphi 0, %s82
    %s97 = sphi 0, %s83
    %s101 = sphi 0, %s101
    %s103 = sphi 0, %s101
    %s104 = sphi 0, %s103
    %s118 = sphi 0, %s104
    %s122 = sphi 0, %s122
    %s124 = sphi 0, %s122
    %s125 = sphi 0, %s124
    %s139 = sphi 0, %s125
    %s145 = sphi 0, %s147
    %s148 = sphi 0, %s145
    %s149 = sphi 0, %s148
    %s165 = sphi 0, %s149
  $region4: #{image_embedder_forward.1} parent=0 // loop_header_branch
    %14 = sbr.rel (%p12) target = $region8
  $region5: #{image_embedder_forward.1} parent=0 // loop_body
    %s16 = ssub.s32 %s11, 1
    %s17 = ssub.s32 %s11, 2
    %s24 = sadd.s32 1, %s19
    %p25 = scmp.ge.s32.totalorder %s24, 1
    %s26 = scalar_select %p25, 0, %s24
    %s27 = sadd.s32 1, %s18
    %s28 = scalar_select %p25, %s27, %s18
    %p29 = scmp.ge.s32.totalorder %s28, 2
    %s30 = scalar_select %p29, 0, %s28
    %s31 = ssub.s32 %s18, %s30
    %s32 = ssub.s32 %s19, %s26
    %s33 = sor.u32 %s31, %s32
    %p34 = scmp.eq.s32.totalorder %s33, 0
    %s36 = sadd.s32 %s35, 1
    %s37 = scalar_select %p34, %s35, %s36
    %p40 = pneg %p34
    %p41 = scmp.eq.s32.totalorder %s11, 1
    %p42 = por %p40, %p41
    %p43 = scmp.ne.s32.totalorder %s35, %s38
    %p44 = scmp.eq.s32.totalorder %s11, 0
    %p45 = por %p43, %p44
    %p46 = scmp.ne.s32.totalorder %s35, %s38
    %p47 = scmp.eq.s32.totalorder %s16, 1
    %p48 = por %p46, %p47
    %p49 = scmp.ne.s32.totalorder %s38, %s39
    %p50 = scmp.eq.s32.totalorder %s16, 0
    %p51 = por %p49, %p50
    %p52 = scmp.ne.s32.totalorder %s38, %s39
    %p53 = scmp.eq.s32.totalorder %s17, 1
    %p54 = por %p52, %p53
    %p56 = scmp.ne.s32.totalorder %s39, %s55
    %p57 = scmp.eq.s32.totalorder %s17, 0
    %p58 = por %p56, %p57
    %s60 = sadd.s32 %s59, 1
    %p63 = scmp.eq.s32.totalorder %s11, 1
    %p64 = scmp.ne.s32.totalorder %s59, %s61
    %p65 = scmp.eq.s32.totalorder %s11, 0
    %p66 = por %p64, %p65
    %p67 = scmp.ne.s32.totalorder %s59, %s61
    %p68 = scmp.eq.s32.totalorder %s16, 1
    %p69 = por %p67, %p68
    %p70 = scmp.ne.s32.totalorder %s61, %s62
    %p71 = scmp.eq.s32.totalorder %s16, 0
    %p72 = por %p70, %p71
    %p73 = scmp.ne.s32.totalorder %s61, %s62
    %p74 = scmp.eq.s32.totalorder %s17, 1
    %p75 = por %p73, %p74
    %p77 = scmp.ne.s32.totalorder %s62, %s76
    %p78 = scmp.eq.s32.totalorder %s17, 0
    %p79 = por %p77, %p78
    %s81 = sadd.s32 %s80, 1
    %p84 = scmp.eq.s32.totalorder %s11, 1
    %p85 = scmp.ne.s32.totalorder %s80, %s82
    %p86 = scmp.eq.s32.totalorder %s11, 0
    %p87 = por %p85, %p86
    %p88 = scmp.ne.s32.totalorder %s80, %s82
    %p89 = scmp.eq.s32.totalorder %s16, 1
    %p90 = por %p88, %p89
    %p91 = scmp.ne.s32.totalorder %s82, %s83
    %p92 = scmp.eq.s32.totalorder %s16, 0
    %p93 = por %p91, %p92
    %p94 = scmp.ne.s32.totalorder %s82, %s83
    %p95 = scmp.eq.s32.totalorder %s17, 1
    %p96 = por %p94, %p95
    %p98 = scmp.ne.s32.totalorder %s83, %s97
    %p99 = scmp.eq.s32.totalorder %s17, 0
    %p100 = por %p98, %p99
    %s102 = sadd.s32 %s101, 1
    %p105 = scmp.eq.s32.totalorder %s11, 1
    %p106 = scmp.ne.s32.totalorder %s101, %s103
    %p107 = scmp.eq.s32.totalorder %s11, 0
    %p108 = por %p106, %p107
    %p109 = scmp.ne.s32.totalorder %s101, %s103
    %p110 = scmp.eq.s32.totalorder %s16, 1
    %p111 = por %p109, %p110
    %p112 = scmp.ne.s32.totalorder %s103, %s104
    %p113 = scmp.eq.s32.totalorder %s16, 0
    %p114 = por %p112, %p113
    %p115 = scmp.ne.s32.totalorder %s103, %s104
    %p116 = scmp.eq.s32.totalorder %s17, 1
    %p117 = por %p115, %p116
    %p119 = scmp.ne.s32.totalorder %s104, %s118
    %p120 = scmp.eq.s32.totalorder %s17, 0
    %p121 = por %p119, %p120
    %s123 = sadd.s32 %s122, 1
    %p126 = scmp.eq.s32.totalorder %s11, 1
    %p127 = scmp.ne.s32.totalorder %s122, %s124
    %p128 = scmp.eq.s32.totalorder %s11, 0
    %p129 = por %p127, %p128
    %p130 = scmp.ne.s32.totalorder %s122, %s124
    %p131 = scmp.eq.s32.totalorder %s16, 1
    %p132 = por %p130, %p131
    %p133 = scmp.ne.s32.totalorder %s124, %s125
    %p134 = scmp.eq.s32.totalorder %s16, 0
    %p135 = por %p133, %p134
    %p136 = scmp.ne.s32.totalorder %s124, %s125
    %p137 = scmp.eq.s32.totalorder %s17, 1
    %p138 = por %p136, %p137
    %p140 = scmp.ne.s32.totalorder %s125, %s139
    %p141 = scmp.eq.s32.totalorder %s17, 0
    %p142 = por %p140, %p141
    %s143 = ssub.s32 %s18, %s30
    %p144 = scmp.eq.s32.totalorder %s143, 0
    %s146 = sadd.s32 %s145, 1
    %s147 = scalar_select %p144, %s145, %s146
    %p150 = pneg %p144
    %p151 = scmp.eq.s32.totalorder %s11, 1
    %p152 = por %p150, %p151
    %p153 = scmp.ne.s32.totalorder %s145, %s148
    %p154 = scmp.eq.s32.totalorder %s11, 0
    %p155 = por %p153, %p154
    %p156 = scmp.ne.s32.totalorder %s145, %s148
    %p157 = scmp.eq.s32.totalorder %s16, 1
    %p158 = por %p156, %p157
    %p159 = scmp.ne.s32.totalorder %s148, %s149
    %p160 = scmp.eq.s32.totalorder %s16, 0
    %p161 = por %p159, %p160
    %p162 = scmp.ne.s32.totalorder %s148, %s149
    %p163 = scmp.eq.s32.totalorder %s17, 1
    %p164 = por %p162, %p163
    %p166 = scmp.ne.s32.totalorder %s149, %s165
    %p167 = scmp.eq.s32.totalorder %s17, 0
    %p168 = por %p166, %p167
    %p169 = scmp.le.s32.totalorder 1, %s11
    %p170 = scmp.lt.s32.totalorder %s11, 3
    %p171 = pnand %p169, %p170
    %p172 = pneg %p171
    // Predicated region
    $region9: #{image_embedder_forward.1} parent=5 // pred_check
      _
    $region10: #{image_embedder_forward.1} parent=5 // pred_check_branch
      %174 = sbr.rel (%p171) target = $region12
    $region11: #{image_embedder_forward.1} parent=5 // pred_region
      %s175 = ssub.s32 %s11, 1
      // Predicated region
      $region13: #{image_embedder_forward.1} parent=11 // pred_check
        %p176 = pneg %p72
      $region14: #{image_embedder_forward.1} parent=11 // pred_check_branch
        %178 = sbr.rel (%p176) target = $region16
      $region15: #{image_embedder_forward.1} parent=11 // pred_region
        _
      $region16: #{image_embedder_forward.1} parent=11 // pred_fallthru
        _
      // Predicated region
      $region17: #{image_embedder_forward.1} parent=11 // pred_check
        %p179 = pneg %p93
      $region18: #{image_embedder_forward.1} parent=11 // pred_check_branch
        %181 = sbr.rel (%p179) target = $region20
      $region19: #{image_embedder_forward.1} parent=11 // pred_region
        _
      $region20: #{image_embedder_forward.1} parent=11 // pred_fallthru
        _
      // Predicated region
      $region21: #{image_embedder_forward.1} parent=11 // pred_check
        %p182 = pneg %p114
      $region22: #{image_embedder_forward.1} parent=11 // pred_check_branch
        %184 = sbr.rel (%p182) target = $region24
      $region23: #{image_embedder_forward.1} parent=11 // pred_region
        _
      $region24: #{image_embedder_forward.1} parent=11 // pred_fallthru
        _
      // Predicated region
      $region25: #{image_embedder_forward.1} parent=11 // pred_check
        %p185 = pneg %p135
      $region26: #{image_embedder_forward.1} parent=11 // pred_check_branch
        %187 = sbr.rel (%p185) target = $region28
      $region27: #{image_embedder_forward.1} parent=11 // pred_region
        _
      $region28: #{image_embedder_forward.1} parent=11 // pred_fallthru
        _
    $region12: #{image_embedder_forward.1} parent=5 // pred_fallthru
      _
    %p188 = scmp.lt.s32.totalorder %s11, 2
    // Predicated region
    $region29: #{image_embedder_forward.1} parent=5 // pred_check
      %p189 = pneg %p188
    $region30: #{image_embedder_forward.1} parent=5 // pred_check_branch
      %191 = sbr.rel (%p189) target = $region32
    $region31: #{image_embedder_forward.1} parent=5 // pred_region
      // Predicated region
      $region33: #{image_embedder_forward.1} parent=31 // pred_check
        %p192 = pneg %p45
      $region34: #{image_embedder_forward.1} parent=31 // pred_check_branch
        %194 = sbr.rel (%p192) target = $region36
      $region35: #{image_embedder_forward.1} parent=31 // pred_region
        %s195 = smul.u32 32, %s19
        %p196 = scmp.lt.s32.totalorder %s18, 1
        %s197 = scalar_select %p196, %s18, 1
        %p198 = scmp.lt.s32.totalorder %s195, 31
        %s199 = scalar_select %p198, %s195, 31
        %s200 = smul.addr %s197, 32
        %s201 = sadd.s32 %s199, %s200
        %s202 = smul.addr %s201, 4
        %s203 = scalar_lea.vmem %s0, %s202
        %s204 = smul.u32 32, %s19
      $region36: #{image_embedder_forward.1} parent=31 // pred_fallthru
        _
    $region32: #{image_embedder_forward.1} parent=5 // pred_fallthru
      _
    %p205 = scmp.le.s32.totalorder 1, %s11
    %p206 = scmp.lt.s32.totalorder %s11, 3
    %p207 = pnand %p205, %p206
    %p208 = pneg %p207
    // Predicated region
    $region37: #{image_embedder_forward.1} parent=5 // pred_check
      _
    $region38: #{image_embedder_forward.1} parent=5 // pred_check_branch
      %210 = sbr.rel (%p207) target = $region40
    $region39: #{image_embedder_forward.1} parent=5 // pred_region
      %s211 = ssub.s32 %s11, 1
      %s212 = smul.u32 32, %s21
      %p213 = scmp.lt.s32.totalorder %s20, 1
      %s214 = scalar_select %p213, %s20, 1
      %p215 = scmp.lt.s32.totalorder %s212, 31
      %s216 = scalar_select %p215, %s212, 31
      %s217 = smul.addr %s214, 32
      %s218 = sadd.s32 %s216, %s217
      %s219 = smul.addr %s218, 4
      %s220 = scalar_lea.vmem %s0, %s219
      %p221 = pneg %p51
      %p222 = pneg %p48
      %p223 = pneg %p72
      %p224 = pneg %p69
      %p225 = pneg %p93
      %p226 = pneg %p90
      %p227 = pneg %p114
      %p228 = pneg %p111
      %p229 = pneg %p135
      %p230 = pneg %p132
      %p231 = pneg %p161
      %p232 = pneg %p158
      %p233 = scmp.lt.s32.totalorder %s20, 1
      %s234 = scalar_select %p233, %s20, 1
      %s235 = smul.addr %s234, 4
      %s236 = scalar_lea.vmem %s5, %s235
      %s237 = smul.u32 32, %s21
      %p238 = scmp.lt.s32.totalorder %s20, 1
      %s239 = scalar_select %p238, %s20, 1
      %p240 = scmp.lt.s32.totalorder %s237, 31
      %s241 = scalar_select %p240, %s237, 31
      %s242 = smul.addr %s239, 32
      %s243 = sadd.s32 %s241, %s242
      %s244 = smul.addr %s243, 4
      %s245 = scalar_lea.vmem %s0, %s244
      %s246 = smul.u32 32, %s21
      %p247 = scmp.lt.s32.totalorder %s20, 1
      %s248 = scalar_select %p247, %s20, 1
      %s249 = smul.addr %s248, 4
      %s250 = scalar_lea.vmem %s5, %s249
      %v252 = vld [vmem:[%s245] sm:$0xf]
      %v253 = vld [vmem:[%s245 + $0x4] sm:$0xf]
      %v254 = vld [vmem:[%s245 + $0x8] sm:$0xf]
      %v255 = vld [vmem:[%s245 + $0xc] sm:$0xf]
      %v256 = vld [vmem:[%s245 + $0x10] sm:$0xf]
      %v257 = vld [vmem:[%s245 + $0x14] sm:$0xf]
      %v258 = vld [vmem:[%s245 + $0x18] sm:$0xf]
      %v259 = vld [vmem:[%s245 + $0x1c] sm:$0xf]
      %v260 = vld [vmem:[%s245 + $0x20] sm:$0xf]
      %v261 = vld [vmem:[%s245 + $0x24] sm:$0xf]
      %v262 = vld [vmem:[%s245 + $0x28] sm:$0xf]
      %v263 = vld [vmem:[%s245 + $0x2c] sm:$0xf]
      %v264 = vld [vmem:[%s245 + $0x30] sm:$0xf]
      %v265 = vld [vmem:[%s245 + $0x34] sm:$0xf]
      %v266 = vld [vmem:[%s245 + $0x38] sm:$0xf]
      %v267 = vld [vmem:[%s245 + $0x3c] sm:$0xf]
      %v268 = vld [vmem:[%s245 + $0x40] sm:$0xf]
      %v269 = vld [vmem:[%s245 + $0x44] sm:$0xf]
      %v270 = vld [vmem:[%s245 + $0x48] sm:$0xf]
      %v271 = vld [vmem:[%s245 + $0x4c] sm:$0xf]
      %v272 = vld [vmem:[%s245 + $0x50] sm:$0xf]
      %v273 = vld [vmem:[%s245 + $0x54] sm:$0xf]
      %v274 = vld [vmem:[%s245 + $0x58] sm:$0xf]
      %v275 = vld [vmem:[%s245 + $0x5c] sm:$0xf]
      %v276 = vld [vmem:[%s245 + $0x60] sm:$0xf]
      %v277 = vld [vmem:[%s245 + $0x64] sm:$0xf]
      %v278 = vld [vmem:[%s245 + $0x68] sm:$0xf]
      %v279 = vld [vmem:[%s245 + $0x6c] sm:$0xf]
      %v280 = vld [vmem:[%s245 + $0x70] sm:$0xf]
      %v281 = vld [vmem:[%s245 + $0x74] sm:$0xf]
      %v282 = vld [vmem:[%s245 + $0x78] sm:$0xf]
      %v283 = vld [vmem:[%s245 + $0x7c] sm:$0xf]
      %v284 = vld [vmem:[%s1] sm:$0xf]
      %v285 = vld [vmem:[%s1 + $0x4] sm:$0xf]
      %v286 = vld [vmem:[%s1 + $0x8] sm:$0xf]
      %v287 = vld [vmem:[%s1 + $0xc] sm:$0xf]
      %v288 = vld [vmem:[%s1 + $0x10] sm:$0xf]
      %v289 = vld [vmem:[%s2] sm:$0x1]
      %v291 = vlaneseq
      %v292 = vshrl.u32 %v291, 7
      %v293 = vsub.s32 0, %v292
      %v294 = vrot.slane %v289, %v293
      %v328 = vunpack.c.l.b16 %v252
      %v329 = vunpack.c.l.b16 %v253
      %v330 = vunpack.c.l.b16 %v254
      %v331 = vunpack.c.l.b16 %v255
      %v332 = vunpack.c.l.b16 %v256
      %v333 = vunpack.c.l.b16 %v257
      %v334 = vunpack.c.l.b16 %v258
      %v335 = vunpack.c.l.b16 %v259
      %v336 = vunpack.c.l.b16 %v260
      %v337 = vunpack.c.l.b16 %v261
      %v338 = vunpack.c.l.b16 %v262
      %v339 = vunpack.c.l.b16 %v263
      %v340 = vunpack.c.l.b16 %v264
      %v341 = vunpack.c.l.b16 %v265
      %v342 = vunpack.c.l.b16 %v266
      %v343 = vunpack.c.l.b16 %v267
      %v344 = vunpack.c.l.b16 %v268
      %v345 = vunpack.c.l.b16 %v269
      %v346 = vunpack.c.l.b16 %v270
      %v347 = vunpack.c.l.b16 %v271
      %v348 = vunpack.c.l.b16 %v272
      %v349 = vunpack.c.l.b16 %v273
      %v350 = vunpack.c.l.b16 %v274
      %v351 = vunpack.c.l.b16 %v275
      %v352 = vunpack.c.l.b16 %v276
      %v353 = vunpack.c.l.b16 %v277
      %v354 = vunpack.c.l.b16 %v278
      %v355 = vunpack.c.l.b16 %v279
      %v356 = vunpack.c.l.b16 %v280
      %v357 = vunpack.c.l.b16 %v281
      %v358 = vunpack.c.l.b16 %v282
      %v359 = vunpack.c.l.b16 %v283
      %v360 = vpack.c.b16 %v329, %v328
      %v361 = vpack.c.b16 %v331, %v330
      %v362 = vpack.c.b16 %v333, %v332
      %v363 = vpack.c.b16 %v335, %v334
      %v364 = vpack.c.b16 %v337, %v336
      %v365 = vpack.c.b16 %v339, %v338
      %v366 = vpack.c.b16 %v341, %v340
      %v367 = vpack.c.b16 %v343, %v342
      %v368 = vpack.c.b16 %v345, %v344
      %v369 = vpack.c.b16 %v347, %v346
      %v370 = vpack.c.b16 %v349, %v348
      %v371 = vpack.c.b16 %v351, %v350
      %v372 = vpack.c.b16 %v353, %v352
      %v373 = vpack.c.b16 %v355, %v354
      %v374 = vpack.c.b16 %v357, %v356
      %v375 = vpack.c.b16 %v359, %v358
      %v381 = vunpack.c.l.b16 %v284
      %v382 = vunpack.c.l.b16 %v285
      %v383 = vunpack.c.l.b16 %v286
      %v384 = vunpack.c.l.b16 %v287
      %v385 = vunpack.c.l.b16 %v288
      %v386 = vpack.c.b16 %v382, %v381
      %v387 = vpack.c.b16 %v384, %v383
      %v388 = vpack.c.b16 %v385, %v385
      %vm391 = vcmask 326656
      %v393 = vsel %vm391, %v360, 0
      %v396 = vsel %vm391, %v361, 0
      %v399 = vsel %vm391, %v362, 0
      %v402 = vsel %vm391, %v363, 0
      %v405 = vsel %vm391, %v364, 0
      %v408 = vsel %vm391, %v365, 0
      %v411 = vsel %vm391, %v366, 0
      %v414 = vsel %vm391, %v367, 0
      %v417 = vsel %vm391, %v368, 0
      %v420 = vsel %vm391, %v369, 0
      %v423 = vsel %vm391, %v370, 0
      %v426 = vsel %vm391, %v371, 0
      %v429 = vsel %vm391, %v372, 0
      %v432 = vsel %vm391, %v373, 0
      %v435 = vsel %vm391, %v374, 0
      %v438 = vsel %vm391, %v375, 0
      %vm440 = vcmask 1043456
      %v442 = vsel %vm440, %v388, 0
      %444 = vmatprep.subr.bf16.mxu0 0
      %445 = vmatpush1.bf16.msra.mxu0 0
      %446 = vmatprep.subr.bf16.mxu0 0
      %447 = vmatpush1.bf16.msra.mxu0 0
      %448 = vmatprep.subr.bf16.mxu0 0
      %449 = vmatpush1.bf16.msra.mxu0 0
      %450 = vmatprep.subr.bf16.mxu0 0
      %451 = vmatpush1.bf16.msra.mxu0 0
      %452 = vmatprep.subr.bf16.mxu0 0
      %453 = vmatpush1.bf16.msra.mxu0 0
      %454 = vmatprep.subr.bf16.mxu0 0
      %455 = vmatpush1.bf16.msra.mxu0 %v442
      %456 = vmatprep.subr.bf16.mxu0 0
      %457 = vmatpush1.bf16.msra.mxu0 %v387
      %458 = vmatprep.subr.bf16.mxu0 0
      %459 = vmatpush1.bf16.msra.mxu0 %v386
      %460 = vmatprep.subr.bf16.mxu0 0
      %461 = vmatpush2.bf16.msra.mxu0 0
      %462 = vmatprep.subr.bf16.mxu0 0
      %463 = vmatpush2.bf16.msra.mxu0 0
      %464 = vmatprep.subr.bf16.mxu0 0
      %465 = vmatpush2.bf16.msra.mxu0 0
      %466 = vmatprep.subr.bf16.mxu0 0
      %467 = vmatpush2.bf16.msra.mxu0 0
      %468 = vmatprep.subr.bf16.mxu0 0
      %469 = vmatpush2.bf16.msra.mxu0 0
      %470 = vmatprep.subr.bf16.mxu0 0
      %471 = vmatpush2.bf16.msra.mxu0 0
      %472 = vmatprep.subr.bf16.mxu0 0
      %473 = vmatpush2.bf16.msra.mxu0 0
      %474 = vmatprep.subr.bf16.mxu0 0
      %475 = vmatpush2.bf16.msra.mxu0 0
      %476 = vmatprep.mubr.bf16.mxu0 0
      %477 = vmatmul.mubr.bf16.gmra.mxu0 %v393
      %v478 = vpop.f32.mrf.mxu0
      %v479 = vadd.f32 %v294, %v478
      %v480 = vpop.f32.mrf.mxu0
      %v481 = vpop.f32.mrf.mxu0
      %v482 = vadd.f32 %v294, %v481
      %v483 = vpop.f32.mrf.mxu0
      %484 = vmatprep.mubr.bf16.mxu0 0
      %485 = vmatmul.mubr.bf16.gmra.mxu0 %v396
      %v486 = vpop.f32.mrf.mxu0
      %v487 = vadd.f32 %v294, %v486
      %v488 = vpop.f32.mrf.mxu0
      %v489 = vpop.f32.mrf.mxu0
      %v490 = vadd.f32 %v294, %v489
      %v491 = vpop.f32.mrf.mxu0
      %492 = vmatprep.mubr.bf16.mxu0 0
      %493 = vmatmul.mubr.bf16.gmra.mxu0 %v399
      %v494 = vpop.f32.mrf.mxu0
      %v495 = vadd.f32 %v294, %v494
      %v496 = vpop.f32.mrf.mxu0
      %v497 = vpop.f32.mrf.mxu0
      %v498 = vadd.f32 %v294, %v497
      %v499 = vpop.f32.mrf.mxu0
      %500 = vmatprep.mubr.bf16.mxu0 0
      %501 = vmatmul.mubr.bf16.gmra.mxu0 %v402
      %v502 = vpop.f32.mrf.mxu0
      %v503 = vadd.f32 %v294, %v502
      %v504 = vpop.f32.mrf.mxu0
      %v505 = vpop.f32.mrf.mxu0
      %v506 = vadd.f32 %v294, %v505
      %v507 = vpop.f32.mrf.mxu0
      %508 = vmatprep.mubr.bf16.mxu0 0
      %509 = vmatmul.mubr.bf16.gmra.mxu0 %v405
      %v510 = vpop.f32.mrf.mxu0
      %v511 = vadd.f32 %v294, %v510
      %v512 = vpop.f32.mrf.mxu0
      %v513 = vpop.f32.mrf.mxu0
      %v514 = vadd.f32 %v294, %v513
      %v515 = vpop.f32.mrf.mxu0
      %516 = vmatprep.mubr.bf16.mxu0 0
      %517 = vmatmul.mubr.bf16.gmra.mxu0 %v408
      %v518 = vpop.f32.mrf.mxu0
      %v519 = vadd.f32 %v294, %v518
      %v520 = vpop.f32.mrf.mxu0
      %v521 = vpop.f32.mrf.mxu0
      %v522 = vadd.f32 %v294, %v521
      %v523 = vpop.f32.mrf.mxu0
      %524 = vmatprep.mubr.bf16.mxu0 0
      %525 = vmatmul.mubr.bf16.gmra.mxu0 %v411
      %v526 = vpop.f32.mrf.mxu0
      %v527 = vadd.f32 %v294, %v526
      %v528 = vpop.f32.mrf.mxu0
      %v529 = vpop.f32.mrf.mxu0
      %v530 = vadd.f32 %v294, %v529
      %v531 = vpop.f32.mrf.mxu0
      %532 = vmatprep.mubr.bf16.mxu0 0
      %533 = vmatmul.mubr.bf16.gmra.mxu0 %v414
      %v534 = vpop.f32.mrf.mxu0
      %v535 = vadd.f32 %v294, %v534
      %v536 = vpop.f32.mrf.mxu0
      %v537 = vpop.f32.mrf.mxu0
      %v538 = vadd.f32 %v294, %v537
      %v539 = vpop.f32.mrf.mxu0
      %540 = vmatprep.mubr.bf16.mxu0 0
      %541 = vmatmul.mubr.bf16.gmra.mxu0 %v417
      %v542 = vpop.f32.mrf.mxu0
      %v543 = vadd.f32 %v294, %v542
      %v544 = vpop.f32.mrf.mxu0
      %v545 = vpop.f32.mrf.mxu0
      %v546 = vadd.f32 %v294, %v545
      %v547 = vpop.f32.mrf.mxu0
      %548 = vmatprep.mubr.bf16.mxu0 0
      %549 = vmatmul.mubr.bf16.gmra.mxu0 %v420
      %v550 = vpop.f32.mrf.mxu0
      %v551 = vadd.f32 %v294, %v550
      %v552 = vpop.f32.mrf.mxu0
      %v553 = vpop.f32.mrf.mxu0
      %v554 = vadd.f32 %v294, %v553
      %v555 = vpop.f32.mrf.mxu0
      %556 = vmatprep.mubr.bf16.mxu0 0
      %557 = vmatmul.mubr.bf16.gmra.mxu0 %v423
      %v558 = vpop.f32.mrf.mxu0
      %v559 = vadd.f32 %v294, %v558
      %v560 = vpop.f32.mrf.mxu0
      %v561 = vpop.f32.mrf.mxu0
      %v562 = vadd.f32 %v294, %v561
      %v563 = vpop.f32.mrf.mxu0
      %564 = vmatprep.mubr.bf16.mxu0 0
      %565 = vmatmul.mubr.bf16.gmra.mxu0 %v426
      %v566 = vpop.f32.mrf.mxu0
      %v567 = vadd.f32 %v294, %v566
      %v568 = vpop.f32.mrf.mxu0
      %v569 = vpop.f32.mrf.mxu0
      %v570 = vadd.f32 %v294, %v569
      %v571 = vpop.f32.mrf.mxu0
      %572 = vmatprep.mubr.bf16.mxu0 0
      %573 = vmatmul.mubr.bf16.gmra.mxu0 %v429
      %v574 = vpop.f32.mrf.mxu0
      %v575 = vadd.f32 %v294, %v574
      %v576 = vpop.f32.mrf.mxu0
      %v577 = vpop.f32.mrf.mxu0
      %v578 = vadd.f32 %v294, %v577
      %v579 = vpop.f32.mrf.mxu0
      %580 = vmatprep.mubr.bf16.mxu0 0
      %581 = vmatmul.mubr.bf16.gmra.mxu0 %v432
      %v582 = vpop.f32.mrf.mxu0
      %v583 = vadd.f32 %v294, %v582
      %v584 = vpop.f32.mrf.mxu0
      %v585 = vpop.f32.mrf.mxu0
      %v586 = vadd.f32 %v294, %v585
      %v587 = vpop.f32.mrf.mxu0
      %588 = vmatprep.mubr.bf16.mxu0 0
      %589 = vmatmul.mubr.bf16.gmra.mxu0 %v435
      %v590 = vpop.f32.mrf.mxu0
      %v591 = vadd.f32 %v294, %v590
      %v592 = vpop.f32.mrf.mxu0
      %v593 = vpop.f32.mrf.mxu0
      %v594 = vadd.f32 %v294, %v593
      %v595 = vpop.f32.mrf.mxu0
      %596 = vmatprep.mubr.bf16.mxu0 0
      %597 = vmatmul.mubr.bf16.gmra.mxu0 %v438
      %v598 = vpop.f32.mrf.mxu0
      %v599 = vadd.f32 %v294, %v598
      %v600 = vpop.f32.mrf.mxu0
      %v601 = vpop.f32.mrf.mxu0
      %v602 = vadd.f32 %v294, %v601
      %v603 = vpop.f32.mrf.mxu0
      %604 = vdwg.mxu0
      %v605 = vmax.f32 %v479, 0.0
      %v606 = vmax.f32 %v482, 0.0
      %v607 = vmax.f32 %v487, 0.0
      %v608 = vmax.f32 %v490, 0.0
      %v609 = vmax.f32 %v495, 0.0
      %v610 = vmax.f32 %v498, 0.0
      %v611 = vmax.f32 %v503, 0.0
      %v612 = vmax.f32 %v506, 0.0
      %v613 = vmax.f32 %v511, 0.0
      %v614 = vmax.f32 %v514, 0.0
      %v615 = vmax.f32 %v519, 0.0
      %v616 = vmax.f32 %v522, 0.0
      %v617 = vmax.f32 %v527, 0.0
      %v618 = vmax.f32 %v530, 0.0
      %v619 = vmax.f32 %v535, 0.0
      %v620 = vmax.f32 %v538, 0.0
      %v621 = vmax.f32 %v543, 0.0
      %v622 = vmax.f32 %v546, 0.0
      %v623 = vmax.f32 %v551, 0.0
      %v624 = vmax.f32 %v554, 0.0
      %v625 = vmax.f32 %v559, 0.0
      %v626 = vmax.f32 %v562, 0.0
      %v627 = vmax.f32 %v567, 0.0
      %v628 = vmax.f32 %v570, 0.0
      %v629 = vmax.f32 %v575, 0.0
      %v630 = vmax.f32 %v578, 0.0
      %v631 = vmax.f32 %v583, 0.0
      %v632 = vmax.f32 %v586, 0.0
      %v633 = vmax.f32 %v591, 0.0
      %v634 = vmax.f32 %v594, 0.0
      %v635 = vmax.f32 %v599, 0.0
      %v636 = vmax.f32 %v602, 0.0
      %v637 = vadd.f32 %v605, %v606
      %v638 = vadd.f32 %v637, %v607
      %v639 = vadd.f32 %v638, %v608
      %v640 = vadd.f32 %v639, %v609
      %v641 = vadd.f32 %v640, %v610
      %v642 = vadd.f32 %v641, %v611
      %v643 = vadd.f32 %v642, %v612
      %v644 = vadd.f32 %v643, %v613
      %v645 = vadd.f32 %v644, %v614
      %v646 = vadd.f32 %v645, %v615
      %v647 = vadd.f32 %v646, %v616
      %v648 = vadd.f32 %v647, %v617
      %v649 = vadd.f32 %v648, %v618
      %v650 = vadd.f32 %v649, %v619
      %v651 = vadd.f32 %v650, %v620
      %v652 = vadd.f32 %v651, %v621
      %v653 = vadd.f32 %v652, %v622
      %v654 = vadd.f32 %v653, %v623
      %v655 = vadd.f32 %v654, %v624
      %v656 = vadd.f32 %v655, %v625
      %v657 = vadd.f32 %v656, %v626
      %v658 = vadd.f32 %v657, %v627
      %v659 = vadd.f32 %v658, %v628
      %v660 = vadd.f32 %v659, %v629
      %v661 = vadd.f32 %v660, %v630
      %v662 = vadd.f32 %v661, %v631
      %v663 = vadd.f32 %v662, %v632
      %v664 = vadd.f32 %v663, %v633
      %v665 = vadd.f32 %v664, %v634
      %v666 = vadd.f32 %v665, %v635
      %v667 = vadd.f32 %v666, %v636
      %v668 = vrot.slane %v667, 4
      %v669 = vadd.f32 %v667, %v668
      %v670 = vrot.slane %v669, 2
      %v671 = vadd.f32 %v669, %v670
      %v672 = vrot.slane %v671, 1
      %v673 = vadd.f32 %v671, %v672
      %v674 = vmul.f32 %v673, 0.00390625
      %v675 = vld [vmem:[%s3] sm:$0xff]
      %v676 = vld [vmem:[%s3 + $0x8] sm:$0xff]
      %v677 = vld [vmem:[%s3 + $0x10] sm:$0xff]
      %v678 = vld [vmem:[%s3 + $0x18] sm:$0xff]
      %v679 = vld [vmem:[%s3 + $0x20] sm:$0xff]
      %v680 = vld [vmem:[%s3 + $0x28] sm:$0xff]
      %v681 = vld [vmem:[%s3 + $0x30] sm:$0xff]
      %v682 = vld [vmem:[%s3 + $0x38] sm:$0xff]
      %v683 = vld [vmem:[%s3 + $0x40] sm:$0xff]
      %v684 = vld [vmem:[%s3 + $0x48] sm:$0xff]
      %v685 = vld [vmem:[%s3 + $0x50] sm:$0xff]
      %v686 = vld [vmem:[%s3 + $0x58] sm:$0xff]
      %v687 = vld [vmem:[%s3 + $0x60] sm:$0xff]
      %v688 = vld [vmem:[%s3 + $0x68] sm:$0xff]
      %v689 = vld [vmem:[%s3 + $0x70] sm:$0xff]
      %v690 = vld [vmem:[%s3 + $0x78] sm:$0xff]
      %v691 = vld [vmem:[%s3 + $0x80] sm:$0xff]
      %v692 = vld [vmem:[%s3 + $0x88] sm:$0xff]
      %v693 = vld [vmem:[%s3 + $0x90] sm:$0xff]
      %v694 = vld [vmem:[%s3 + $0x98] sm:$0xff]
      %v695 = vld [vmem:[%s3 + $0xa0] sm:$0xff]
      %v696 = vld [vmem:[%s3 + $0xa8] sm:$0xff]
      %v697 = vld [vmem:[%s3 + $0xb0] sm:$0xff]
      %v698 = vld [vmem:[%s3 + $0xb8] sm:$0xff]
      %v699 = vld [vmem:[%s3 + $0xc0] sm:$0xff]
      %v700 = vld [vmem:[%s3 + $0xc8] sm:$0xff]
      %v701 = vld [vmem:[%s3 + $0xd0] sm:$0xff]
      %v702 = vld [vmem:[%s3 + $0xd8] sm:$0xff]
      %v703 = vld [vmem:[%s3 + $0xe0] sm:$0xff]
      %v704 = vld [vmem:[%s3 + $0xe8] sm:$0xff]
      %v705 = vld [vmem:[%s3 + $0xf0] sm:$0xff]
      %v706 = vld [vmem:[%s3 + $0xf8] sm:$0xff]
      %v707 = vld [vmem:[%s3 + $0x100] sm:$0xff]
      %v708 = vld [vmem:[%s3 + $0x108] sm:$0xff]
      %v709 = vld [vmem:[%s3 + $0x110] sm:$0xff]
      %v710 = vld [vmem:[%s3 + $0x118] sm:$0xff]
      %v711 = vld [vmem:[%s3 + $0x120] sm:$0xff]
      %v712 = vld [vmem:[%s3 + $0x128] sm:$0xff]
      %v713 = vld [vmem:[%s3 + $0x130] sm:$0xff]
      %v714 = vld [vmem:[%s3 + $0x138] sm:$0xff]
      %v715 = vld [vmem:[%s3 + $0x140] sm:$0xff]
      %v716 = vld [vmem:[%s3 + $0x148] sm:$0xff]
      %v717 = vld [vmem:[%s3 + $0x150] sm:$0xff]
      %v718 = vld [vmem:[%s3 + $0x158] sm:$0xff]
      %v719 = vld [vmem:[%s3 + $0x160] sm:$0xff]
      %v720 = vld [vmem:[%s3 + $0x168] sm:$0xff]
      %v721 = vld [vmem:[%s3 + $0x170] sm:$0xff]
      %v722 = vld [vmem:[%s3 + $0x178] sm:$0xff]
      %v723 = vld [vmem:[%s3 + $0x180] sm:$0xff]
      %v724 = vld [vmem:[%s3 + $0x188] sm:$0xff]
      %v725 = vld [vmem:[%s3 + $0x190] sm:$0xff]
      %v726 = vld [vmem:[%s3 + $0x198] sm:$0xff]
      %v727 = vld [vmem:[%s3 + $0x1a0] sm:$0xff]
      %v728 = vld [vmem:[%s3 + $0x1a8] sm:$0xff]
      %v729 = vld [vmem:[%s3 + $0x1b0] sm:$0xff]
      %v730 = vld [vmem:[%s3 + $0x1b8] sm:$0xff]
      %v731 = vld [vmem:[%s3 + $0x1c0] sm:$0xff]
      %v732 = vld [vmem:[%s3 + $0x1c8] sm:$0xff]
      %v733 = vld [vmem:[%s3 + $0x1d0] sm:$0xff]
      %v734 = vld [vmem:[%s3 + $0x1d8] sm:$0xff]
      %v735 = vld [vmem:[%s3 + $0x1e0] sm:$0xff]
      %v736 = vld [vmem:[%s3 + $0x1e8] sm:$0xff]
      %v737 = vld [vmem:[%s3 + $0x1f0] sm:$0xff]
      %v738 = vld [vmem:[%s3 + $0x1f8] sm:$0xff]
      %v739 = vld [vmem:[%s4] sm:$0xf]
      %v741 = vlaneseq
      %v742 = vshrl.u32 %v741, 7
      %v743 = vsub.s32 0, %v742
      %v744 = vrot.slane %v739, %v743
      %v745 = vlaneseq
      %v746 = vshrl.u32 %v745, 7
      %v747 = vsub.s32 1, %v746
      %v748 = vrot.slane %v739, %v747
      %v749 = vlaneseq
      %v750 = vshrl.u32 %v749, 7
      %v751 = vsub.s32 2, %v750
      %v752 = vrot.slane %v739, %v751
      %v753 = vlaneseq
      %v754 = vshrl.u32 %v753, 7
      %v755 = vsub.s32 3, %v754
      %v756 = vrot.slane %v739, %v755
      %761 = vmatprep.subr.mxu0 %v736
      %762 = vmatpush1.msra.mxu0 %v735
      %763 = vmatprep.subr.mxu0 %v732
      %764 = vmatpush1.msra.mxu0 %v731
      %765 = vmatprep.subr.mxu0 %v728
      %766 = vmatpush1.msra.mxu0 %v727
      %767 = vmatprep.subr.mxu0 %v724
      %768 = vmatpush1.msra.mxu0 %v723
      %769 = vmatprep.subr.mxu0 %v720
      %770 = vmatpush1.msra.mxu0 %v719
      %771 = vmatprep.subr.mxu0 %v716
      %772 = vmatpush1.msra.mxu0 %v715
      %773 = vmatprep.subr.mxu0 %v712
      %774 = vmatpush1.msra.mxu0 %v711
      %775 = vmatprep.subr.mxu0 %v708
      %776 = vmatpush1.msra.mxu0 %v707
      %777 = vmatprep.subr.mxu0 %v704
      %778 = vmatpush1.msra.mxu0 %v703
      %779 = vmatprep.subr.mxu0 %v700
      %780 = vmatpush1.msra.mxu0 %v699
      %781 = vmatprep.subr.mxu0 %v696
      %782 = vmatpush1.msra.mxu0 %v695
      %783 = vmatprep.subr.mxu0 %v692
      %784 = vmatpush1.msra.mxu0 %v691
      %785 = vmatprep.subr.mxu0 %v688
      %786 = vmatpush1.msra.mxu0 %v687
      %787 = vmatprep.subr.mxu0 %v684
      %788 = vmatpush1.msra.mxu0 %v683
      %789 = vmatprep.subr.mxu0 %v680
      %790 = vmatpush1.msra.mxu0 %v679
      %791 = vmatprep.subr.mxu0 %v676
      %792 = vmatpush1.msra.mxu0 %v675
      %793 = vmatprep.subr.mxu0 0.0
      %794 = vmatpush2.msra.mxu0 0.0
      %795 = vmatprep.subr.mxu0 0.0
      %796 = vmatpush2.msra.mxu0 0.0
      %797 = vmatprep.subr.mxu0 0.0
      %798 = vmatpush2.msra.mxu0 0.0
      %799 = vmatprep.subr.mxu0 0.0
      %800 = vmatpush2.msra.mxu0 0.0
      %801 = vmatprep.subr.mxu0 0.0
      %802 = vmatpush2.msra.mxu0 0.0
      %803 = vmatprep.subr.mxu0 0.0
      %804 = vmatpush2.msra.mxu0 0.0
      %805 = vmatprep.subr.mxu0 0.0
      %806 = vmatpush2.msra.mxu0 0.0
      %807 = vmatprep.subr.mxu0 0.0
      %808 = vmatpush2.msra.mxu0 0.0
      %809 = vmatprep.subr.mxu0 0.0
      %810 = vmatpush2.msra.mxu0 0.0
      %811 = vmatprep.subr.mxu0 0.0
      %812 = vmatpush2.msra.mxu0 0.0
      %813 = vmatprep.subr.mxu0 0.0
      %814 = vmatpush2.msra.mxu0 0.0
      %815 = vmatprep.subr.mxu0 0.0
      %816 = vmatpush2.msra.mxu0 0.0
      %817 = vmatprep.subr.mxu0 0.0
      %818 = vmatpush2.msra.mxu0 0.0
      %819 = vmatprep.subr.mxu0 0.0
      %820 = vmatpush2.msra.mxu0 0.0
      %821 = vmatprep.subr.mxu0 0.0
      %822 = vmatpush2.msra.mxu0 0.0
      %823 = vmatprep.subr.mxu0 0.0
      %824 = vmatpush2.msra.mxu0 0.0
      %825 = vmatprep.mubr.f32.mxu0 0.0
      %826 = vmatmul.mubr.f32.gmra.mxu0 %v674
      %v827 = vpop.f32.mrf.mxu0
      %v828 = vadd.f32 %v744, %v827
      %v829 = vpop.f32.mrf.mxu0
      %v830 = vadd.f32 %v748, %v829
      %831 = vdwg.mxu0
      %832 = vmatprep.subr.mxu0 %v738
      %833 = vmatpush1.msra.mxu0 %v737
      %834 = vmatprep.subr.mxu0 %v734
      %835 = vmatpush1.msra.mxu0 %v733
      %836 = vmatprep.subr.mxu0 %v730
      %837 = vmatpush1.msra.mxu0 %v729
      %838 = vmatprep.subr.mxu0 %v726
      %839 = vmatpush1.msra.mxu0 %v725
      %840 = vmatprep.subr.mxu0 %v722
      %841 = vmatpush1.msra.mxu0 %v721
      %842 = vmatprep.subr.mxu0 %v718
      %843 = vmatpush1.msra.mxu0 %v717
      %844 = vmatprep.subr.mxu0 %v714
      %845 = vmatpush1.msra.mxu0 %v713
      %846 = vmatprep.subr.mxu0 %v710
      %847 = vmatpush1.msra.mxu0 %v709
      %848 = vmatprep.subr.mxu0 %v706
      %849 = vmatpush1.msra.mxu0 %v705
      %850 = vmatprep.subr.mxu0 %v702
      %851 = vmatpush1.msra.mxu0 %v701
      %852 = vmatprep.subr.mxu0 %v698
      %853 = vmatpush1.msra.mxu0 %v697
      %854 = vmatprep.subr.mxu0 %v694
      %855 = vmatpush1.msra.mxu0 %v693
      %856 = vmatprep.subr.mxu0 %v690
      %857 = vmatpush1.msra.mxu0 %v689
      %858 = vmatprep.subr.mxu0 %v686
      %859 = vmatpush1.msra.mxu0 %v685
      %860 = vmatprep.subr.mxu0 %v682
      %861 = vmatpush1.msra.mxu0 %v681
      %862 = vmatprep.subr.mxu0 %v678
      %863 = vmatpush1.msra.mxu0 %v677
      %864 = vmatprep.subr.mxu0 0.0
      %865 = vmatpush2.msra.mxu0 0.0
      %866 = vmatprep.subr.mxu0 0.0
      %867 = vmatpush2.msra.mxu0 0.0
      %868 = vmatprep.subr.mxu0 0.0
      %869 = vmatpush2.msra.mxu0 0.0
      %870 = vmatprep.subr.mxu0 0.0
      %871 = vmatpush2.msra.mxu0 0.0
      %872 = vmatprep.subr.mxu0 0.0
      %873 = vmatpush2.msra.mxu0 0.0
      %874 = vmatprep.subr.mxu0 0.0
      %875 = vmatpush2.msra.mxu0 0.0
      %876 = vmatprep.subr.mxu0 0.0
      %877 = vmatpush2.msra.mxu0 0.0
      %878 = vmatprep.subr.mxu0 0.0
      %879 = vmatpush2.msra.mxu0 0.0
      %880 = vmatprep.subr.mxu0 0.0
      %881 = vmatpush2.msra.mxu0 0.0
      %882 = vmatprep.subr.mxu0 0.0
      %883 = vmatpush2.msra.mxu0 0.0
      %884 = vmatprep.subr.mxu0 0.0
      %885 = vmatpush2.msra.mxu0 0.0
      %886 = vmatprep.subr.mxu0 0.0
      %887 = vmatpush2.msra.mxu0 0.0
      %888 = vmatprep.subr.mxu0 0.0
      %889 = vmatpush2.msra.mxu0 0.0
      %890 = vmatprep.subr.mxu0 0.0
      %891 = vmatpush2.msra.mxu0 0.0
      %892 = vmatprep.subr.mxu0 0.0
      %893 = vmatpush2.msra.mxu0 0.0
      %894 = vmatprep.subr.mxu0 0.0
      %895 = vmatpush2.msra.mxu0 0.0
      %896 = vmatprep.mubr.f32.mxu0 0.0
      %897 = vmatmul.mubr.f32.gmra.mxu0 %v674
      %v898 = vpop.f32.mrf.mxu0
      %v899 = vadd.f32 %v752, %v898
      %v900 = vpop.f32.mrf.mxu0
      %v901 = vadd.f32 %v756, %v900
      %902 = vdwg.mxu0
      %v903 = vmul.f32 %v828, %v828
      %v904 = vmul.f32 %v830, %v830
      %v905 = vmul.f32 %v899, %v899
      %v906 = vmul.f32 %v901, %v901
      %vm907 = vcmask 1040384
      %v908 = vsel %vm907, %v903, 0.0
      %v909 = vsel %vm907, %v904, 0.0
      %v910 = vadd.f32 %v908, %v909
      %v911 = vsel %vm907, %v905, 0.0
      %v912 = vadd.f32 %v910, %v911
      %v913 = vsel %vm907, %v906, 0.0
      %v914 = vadd.f32 %v912, %v913
      %915 = vadd.xlane.f32.xlu0 %v914
      %v916 = vpop.xlane.xlu0 %915
      %v917 = vmax.f32 %v916, 1e-24
      %v918 = vrsqrt.pop %v917
      %v919 = vmul.f32 %v828, %v918
      %v920 = vmul.f32 %v830, %v918
      %v921 = vmul.f32 %v899, %v918
      %v922 = vmul.f32 %v901, %v918
      %v927 = vcombine.low %v919, %v920
      %v928 = vcombine.low %v921, %v922
      %v930 = vunpack.c.l.s4 1966171168
      %v931 = vunpack.c.0.s8 %v930
      %v932 = vlaneseq
      %v933 = vshrl.u32 %v932, 7
      %v934 = vsub.s32 %v931, %v933
      %v935 = vrot.slane %v927, %v934
      %v937 = vunpack.c.l.s4 1966171168
      %v938 = vunpack.c.0.s8 %v937
      %v939 = vlaneseq
      %v940 = vshrl.u32 %v939, 7
      %v941 = vsub.s32 %v938, %v940
      %v942 = vrot.slane %v928, %v941
      %v943 = vcombine.low %v935, %v942
      %v945 = vunpack.c.l.s4 1966171168
      %v946 = vunpack.c.0.s8 %v945
      %v947 = vlaneseq
      %v948 = vshrl.u32 %v947, 7
      %v949 = vsub.s32 %v946, %v948
      %v950 = vrot.slane %v943, %v949
      %v952 = vlaneseq
      %vm953 = vcmp.ge.s32.totalorder %v952, 0
      %vm954 = vcmp.lt.s32.totalorder %v952, 512
      %vm955 = vmand %vm953, %vm954
      %956 = vst.msk [vmem:[%s250] sm:$0xf] %vm955, %v950
      %p957 = scmp.lt.s32.totalorder %s20, 1
      %s958 = scalar_select %p957, %s20, 1
      %s959 = smul.addr %s958, 4
      %s960 = scalar_lea.vmem %s5, %s959
      // Predicated region
      $region41: #{image_embedder_forward.1} parent=39 // pred_check
        %p961 = pneg %p158
      $region42: #{image_embedder_forward.1} parent=39 // pred_check_branch
        %963 = sbr.rel (%p961) target = $region44
      $region43: #{image_embedder_forward.1} parent=39 // pred_region
        _
      $region44: #{image_embedder_forward.1} parent=39 // pred_fallthru
        _
    $region40: #{image_embedder_forward.1} parent=5 // pred_fallthru
      _
    %p964 = scmp.le.s32.totalorder 2, %s11
    // Predicated region
    $region45: #{image_embedder_forward.1} parent=5 // pred_check
      %p965 = pneg %p964
    $region46: #{image_embedder_forward.1} parent=5 // pred_check_branch
      %967 = sbr.rel (%p965) target = $region48
    $region47: #{image_embedder_forward.1} parent=5 // pred_region
      %s968 = ssub.s32 %s11, 2
      // Predicated region
      $region49: #{image_embedder_forward.1} parent=47 // pred_check
        %p969 = pneg %p164
      $region50: #{image_embedder_forward.1} parent=47 // pred_check_branch
        %971 = sbr.rel (%p969) target = $region52
      $region51: #{image_embedder_forward.1} parent=47 // pred_region
        %p972 = scmp.lt.s32.totalorder %s22, 1
        %s973 = scalar_select %p972, %s22, 1
        %s974 = smul.addr %s973, 4
        %s975 = scalar_lea.vmem %s5, %s974
      $region52: #{image_embedder_forward.1} parent=47 // pred_fallthru
        _
    $region48: #{image_embedder_forward.1} parent=5 // pred_fallthru
      _
  $region6: #{image_embedder_forward.1} parent=0 // loop_footer
    %s15 = sadd.s32 1, %s11
  $region7: #{image_embedder_forward.1} parent=0 // loop_footer_branch
    %10 = sbr.rel target = $region3
  $region8: #{image_embedder_forward.1} parent=0 // loop_exit
    _

</llo_original>
